<compile_context>
chip_gen: v7x
topology: tpu7x:2x2x1
jax: 0.10.0
libtpu: 0.0.40
codegen_flags: <defaults>
</compile_context>

<pallas_src>
import jax
import jax.numpy as jnp
from jax.experimental import pallas as pl
from jax.experimental.pallas import tpu as pltpu


# ----------------------------------------------------------------------------
# Kernels
# ----------------------------------------------------------------------------
def _affine_kernel_multi_k(x_ref, w_ref, b_ref, o_ref, acc_ref):
    """One (tm, tn) output tile; K is the innermost ("arbitrary") grid axis."""
    k = pl.program_id(2)

    @pl.when(k == 0)
    def _init():
        acc_ref[...] = jnp.zeros_like(acc_ref)

    # MXU matmul, f32 accumulation (inputs are compute-dtype, e.g. bf16).
    acc_ref[...] += jnp.dot(
        x_ref[...], w_ref[...], preferred_element_type=jnp.float32
    )

    @pl.when(k == pl.num_programs(2) - 1)
    def _finalize():
        o_ref[...] = (acc_ref[...] + b_ref[...].astype(jnp.float32)).astype(
            o_ref.dtype
        )


def _affine_kernel_single_k(x_ref, w_ref, b_ref, o_ref):
    """K fits in one tile: no accumulator scratch, no per-step control flow."""
    o_ref[...] = (
        jnp.dot(x_ref[...], w_ref[...], preferred_element_type=jnp.float32)
        + b_ref[...].astype(jnp.float32)
    ).astype(o_ref.dtype)


# ----------------------------------------------------------------------------
# Tiling / wrapper
# ----------------------------------------------------------------------------
def _round_up(x: int, m: int) -> int:
    return ((x + m - 1) // m) * m


def _vmem_capacity_bytes() -> int:
    """Per-core VMEM capacity; conservative (v7x-class) fallback."""
    try:
        info = pltpu.get_tpu_info()
        return int(getattr(info, "vmem_capacity_bytes", 64 << 20))
    except Exception:  # not on TPU / older jax: assume the smallest VMEM part
        return 64 << 20


def _select_tiles(M: int, K: int, N: int, vmem_cap: int):
    if vmem_cap <= (64 << 20):
        # v7x-class: 64 MiB VMEM, 2 TensorCores per chip.
        tm_max, tn_max, tk_max = 512, 512, 1024
        dual_tc = True
        vmem_limit_cap = 48 << 20
    else:
        # v5e / v6e-class: 128 MiB VMEM, single TensorCore.
        tm_max, tn_max, tk_max = 1024, 1024, 2048
        dual_tc = False
        vmem_limit_cap = 100 << 20

    tm = min(tm_max, _round_up(M, 8))
    tn = min(tn_max, _round_up(max(N, 128), 128))
    tk = min(tk_max, _round_up(max(K, 128), 128))

    # v7x: make sure at least one "parallel" grid axis has extent >= 2 so both
    # TensorCores get work.
    if dual_tc and _round_up(M, tm) // tm == 1 and _round_up(N, tn) // tn == 1:
        if tn >= 256:
            tn = _round_up(tn // 2, 128)
        elif tm >= 16:
            tm = _round_up(tm // 2, 8)

    return tm, tn, tk, vmem_limit_cap


def model_forward(
    x: jax.Array,
    w: jax.Array,
    b: jax.Array,
    *,
    compute_dtype=jnp.bfloat16,
    out_dtype=None,
) -> jax.Array:
    """Concrete Model.forward: y = x @ W + b via a tiled Pallas TPU kernel."""
    M, K = x.shape
    Kw, N = w.shape
    assert K == Kw and b.shape == (N,)
    out_dtype = out_dtype if out_dtype is not None else x.dtype

    # Tiny-shape fast path: padding to (8,128)-aligned tiles plus the fixed
    # pallas_call cost dominates — XLA's fused dot is strictly faster here.
    if M * K * N < (1 << 21):
        y = (
            jnp.dot(
                x.astype(compute_dtype),
                w.astype(compute_dtype),
                preferred_element_type=jnp.float32,
            )
            + b.astype(jnp.float32)[None, :]
        )
        return y.astype(out_dtype)

    vmem_cap = _vmem_capacity_bytes()
    tm, tn, tk, vmem_limit_cap = _select_tiles(M, K, N, vmem_cap)

    Mp, Kp, Np = _round_up(M, tm), _round_up(K, tk), _round_up(N, tn)

    # Cast only when needed; pad only the ragged case (avoids an extra
    # read+write pass over already-aligned operands before the kernel).
    x_p = x if x.dtype == compute_dtype else x.astype(compute_dtype)
    if (Mp, Kp) != (M, K):
        x_p = jnp.pad(x_p, ((0, Mp - M), (0, Kp - K)))
    w_p = w if w.dtype == compute_dtype else w.astype(compute_dtype)
    if (Kp, Np) != (K, N):
        w_p = jnp.pad(w_p, ((0, Kp - K), (0, Np - N)))
    b_p = b if b.dtype == jnp.float32 else b.astype(jnp.float32)
    if Np != N:
        b_p = jnp.pad(b_p, (0, Np - N))
    b_p = b_p.reshape(1, Np)

    grid_m, grid_n, grid_k = Mp // tm, Np // tn, Kp // tk

    # Scoped-VMEM budget: double-buffered x/W/b tiles + double-buffered output
    # tile + f32 accumulator, with headroom, clamped per generation.
    in_itemsize = jnp.dtype(compute_dtype).itemsize
    out_itemsize = jnp.dtype(out_dtype).itemsize
    vmem_need = (
        2 * (tm * tk + tk * tn + tn) * in_itemsize
        + 2 * tm * tn * out_itemsize
        + tm * tn * 4
    )
    vmem_limit = int(min(max(int(1.5 * vmem_need), 16 << 20), vmem_limit_cap))

    compiler_params_2d = pltpu.CompilerParams(
        dimension_semantics=("parallel", "parallel"),
        vmem_limit_bytes=vmem_limit,
    )
    compiler_params_3d = pltpu.CompilerParams(
        dimension_semantics=("parallel", "parallel", "arbitrary"),
        vmem_limit_bytes=vmem_limit,
    )

    if grid_k == 1:
        # Single-K-step path: Kp == tk, no accumulator round-trip.
        out_p = pl.pallas_call(
            _affine_kernel_single_k,
            out_shape=jax.ShapeDtypeStruct((Mp, Np), out_dtype),
            grid=(grid_m, grid_n),
            in_specs=[
                pl.BlockSpec((tm, Kp), lambda i, j: (i, 0)),   # x stripe
                pl.BlockSpec((Kp, tn), lambda i, j: (0, j)),   # W stripe
                pl.BlockSpec((1, tn), lambda i, j: (0, j)),    # bias
            ],
            out_specs=pl.BlockSpec((tm, tn), lambda i, j: (i, j)),
            compiler_params=compiler_params_2d,
        )(x_p, w_p, b_p)
    else:
        out_p = pl.pallas_call(
            _affine_kernel_multi_k,
            out_shape=jax.ShapeDtypeStruct((Mp, Np), out_dtype),
            grid=(grid_m, grid_n, grid_k),
            in_specs=[
                pl.BlockSpec((tm, tk), lambda i, j, k: (i, k)),   # x tile
                pl.BlockSpec((tk, tn), lambda i, j, k: (k, j)),   # W tile
                pl.BlockSpec((1, tn), lambda i, j, k: (0, j)),    # bias
            ],
            out_specs=pl.BlockSpec((tm, tn), lambda i, j, k: (i, j)),
            scratch_shapes=[pltpu.VMEM((tm, tn), jnp.float32)],
            compiler_params=compiler_params_3d,
        )(x_p, w_p, b_p)

    if (Mp, Np) != (M, N):
        out_p = out_p[:M, :N]
    return out_p


class PallasAffineModel:
    """Minimal concrete realization of `Model`: forward(x) = x @ W + b.

    The weight cast to the MXU compute dtype (and bias cast to f32) is
    hoisted to construction time so per-call work is only the kernel itself.
    """

    def __init__(self, w: jax.Array, b: jax.Array, *, compute_dtype=jnp.bfloat16):
        self.compute_dtype = compute_dtype
        self.w = jnp.asarray(w).astype(compute_dtype)
        self.b = jnp.asarray(b).astype(jnp.float32)

    @property
    def param_count(self):
        total = int(self.w.size + self.b.size)
        return {
            "total_parameters": total,
            "trainable_parameters": total,
            "non_trainable_parameters": 0,
        }

    def __call__(self, x: jax.Array) -> jax.Array:
        return model_forward(
            x, self.w, self.b, compute_dtype=self.compute_dtype, out_dtype=x.dtype
        )


# ----------------------------------------------------------------------------
# Demo / self-check
# ----------------------------------------------------------------------------
def _reference(x, w, b):
    """bf16-input / f32-accumulate reference matching the kernel numerics."""
    x_b = x.astype(jnp.bfloat16).astype(jnp.float32)
    w_b = w.astype(jnp.bfloat16).astype(jnp.float32)
    return (
        jnp.dot(x_b, w_b, precision=jax.lax.Precision.HIGHEST)
        + b.astype(jnp.float32)[None, :]
    )


if __name__ == "__main__":
    # --- Case A: tiny shape consistent with a minimal concrete Model subclass
    #             (exercises the small-shape fast path). -----------------------
    kx, kw, kb = jax.random.split(jax.random.PRNGKey(0), 3)
    batch, d_in, d_out = 8, 32, 32
    x_s = jax.random.normal(kx, (batch, d_in), dtype=jnp.float32)
    w_s = jax.random.normal(kw, (d_in, d_out), dtype=jnp.float32) * 0.02
    b_s = jax.random.normal(kb, (d_out,), dtype=jnp.float32) * 0.02
    model_s = PallasAffineModel(w_s, b_s)
    y_s = jax.block_until_ready(model_s(x_s))
    assert y_s.shape == (batch, d_out)
    assert jnp.allclose(y_s, _reference(x_s, w_s, b_s), atol=2e-3, rtol=2e-3)

    # --- Case B: single-K-step Pallas kernel path. ---------------------------
    kx, kw, kb = jax.random.split(jax.random.PRNGKey(1), 3)
    M1, K1, N1 = 128, 256, 256
    x_1 = jax.random.normal(kx, (M1, K1), dtype=jnp.float32)
    w_1 = jax.random.normal(kw, (K1, N1), dtype=jnp.float32) * 0.02
    b_1 = jax.random.normal(kb, (N1,), dtype=jnp.float32) * 0.02
    model_1 = PallasAffineModel(w_1, b_1)
    y_1 = jax.block_until_ready(model_1(x_1))
    assert y_1.shape == (M1, N1)
    assert jnp.allclose(y_1, _reference(x_1, w_1, b_1), atol=5e-3, rtol=5e-3)

    # --- Case C: multi-K accumulating Pallas kernel path (ragged K, padded). --
    kx, kw, kb = jax.random.split(jax.random.PRNGKey(2), 3)
    M2, K2, N2 = 128, 2176, 512
    x_2 = jax.random.normal(kx, (M2, K2), dtype=jnp.float32)
    w_2 = jax.random.normal(kw, (K2, N2), dtype=jnp.float32) * 0.02
    b_2 = jax.random.normal(kb, (N2,), dtype=jnp.float32) * 0.02
    model_2 = PallasAffineModel(w_2, b_2)
    y_2 = jax.block_until_ready(model_2(x_2))
    assert y_2.shape == (M2, N2)
    assert jnp.allclose(y_2, _reference(x_2, w_2, b_2), atol=5e-3, rtol=5e-3)

    print("KERNEL_OK")
</pallas_src>

<mosaic_0001>
module attributes {stable_mosaic.version = 11 : i64} {
  func.func @_affine_kernel_single_k(%arg0: i32, %arg1: i32, %arg2: memref<128x256xbf16, #tpu.memory_space<vmem>>, %arg3: memref<256x128xbf16, #tpu.memory_space<vmem>>, %arg4: memref<1x128xf32, #tpu.memory_space<vmem>>, %arg5: memref<128x128xf32, #tpu.memory_space<vmem>>) attributes {dimension_semantics = [#tpu.dimension_semantics<parallel>, #tpu.dimension_semantics<parallel>], iteration_bounds = array<i64: 1, 2>, scalar_prefetch = 0 : i64, scratch_operands = 0 : i64, tpu.core_type = #tpu.core_type<tc>, window_params = [{transform_indices = @transform_0, window_bounds = array<i64: 128, 256>}, {transform_indices = @transform_1, window_bounds = array<i64: 256, 128>}, {transform_indices = @transform_2, window_bounds = array<i64: 1, 128>}, {transform_indices = @transform_3, window_bounds = array<i64: 128, 128>}]} {
    %c0 = arith.constant 0 : index
    %c0_0 = arith.constant 0 : index
    %0 = vector.load %arg2[%c0, %c0_0] : memref<128x256xbf16, #tpu.memory_space<vmem>>, vector<128x256xbf16>
    %c0_1 = arith.constant 0 : index
    %c0_2 = arith.constant 0 : index
    %1 = vector.load %arg3[%c0_1, %c0_2] : memref<256x128xbf16, #tpu.memory_space<vmem>>, vector<256x128xbf16>
    %cst = arith.constant dense<0.000000e+00> : vector<128x128xf32>
    %2 = tpu.matmul %0, %1, %cst {dimension_numbers = #tpu.dot_dimension_numbers<[1], [0], [0], [1], [0, 0, 1, 1], [], []>} : vector<128x256xbf16>, vector<256x128xbf16>, vector<128x128xf32> -> vector<128x128xf32>
    %c0_3 = arith.constant 0 : index
    %c0_4 = arith.constant 0 : index
    %3 = vector.load %arg4[%c0_3, %c0_4] : memref<1x128xf32, #tpu.memory_space<vmem>>, vector<1x128xf32>
    %4 = vector.broadcast %3 : vector<1x128xf32> to vector<128x128xf32>
    %5 = arith.addf %2, %4 : vector<128x128xf32>
    %c0_5 = arith.constant 0 : index
    %c0_6 = arith.constant 0 : index
    %6 = vector.load %arg5[%c0_5, %c0_6] : memref<128x128xf32, #tpu.memory_space<vmem>>, vector<128x128xf32>
    tpu.vector_store %arg5[%c0_5, %c0_6], %5 {strides = array<i32>} : memref<128x128xf32, #tpu.memory_space<vmem>>, vector<128x128xf32>,
    return
  }
  func.func @transform_0(%arg0: i32, %arg1: i32) -> (i32, i32) {
    %c0_i32 = arith.constant 0 : i32
    %c0_i32_0 = arith.constant 0 : i32
    return %arg0, %c0_i32 : i32, i32
  }
  func.func @transform_1(%arg0: i32, %arg1: i32) -> (i32, i32) {
    %c0_i32 = arith.constant 0 : i32
    %c0_i32_0 = arith.constant 0 : i32
    return %c0_i32, %arg1 : i32, i32
  }
  func.func @transform_2(%arg0: i32, %arg1: i32) -> (i32, i32) {
    %c0_i32 = arith.constant 0 : i32
    %c0_i32_0 = arith.constant 0 : i32
    return %c0_i32, %arg1 : i32, i32
  }
  func.func @transform_3(%arg0: i32, %arg1: i32) -> (i32, i32) {
    %c0_i32 = arith.constant 0 : i32
    return %arg0, %arg1 : i32, i32
  }
}

</mosaic_0001>

<llo_original>
// kernel: tpu_custom_call.1
$region0: #{tpu_custom_call.1}
  #allocation0 [shape = 'u32[]', space=smem, size = 0x4, offset = 0x4, fixed_abs, tag = 'smem constant byte address 0x4 - core index']
  #allocation1 [shape = 'u32[144,128]{1,0:T(1,128)}', space=vmem, size = 0x12000, scoped, tag = 'internal scratch']
  %s0 = inlined_call_operand.hbm [shape: bf16[128,256], index: 0, kind: input, shape index: {}]
  %s1 = inlined_call_operand.hbm [shape: bf16[256,256], index: 1, kind: input, shape index: {}]
  %s2 = inlined_call_operand.vmem [shape: f32[1,256], index: 2, kind: input, shape index: {}]
  %s3 = inlined_call_operand.hbm [shape: f32[128,256], index: 3, kind: output, shape index: {}]
  %s4 = sld [smem:[#allocation0]]
  $region53: #{tpu_custom_call.1} parent=0
    _
  %s6 = ssub.s32 1, %s4
  %s7 = scalar_select 0, %s6, %s4
  $region1: #{tpu_custom_call.1} parent=0
    #allocation2 [shape = 'u8[65536]{0}', space=vmem, size = 0x10000, scoped, tag = 'input window, operand 0, single buffered']
    #allocation3 [shape = 's32[2]{0}', space=sflag, size = 0x8, scoped, tag = 'scoped memory for tpu_custom_call.1']
    #allocation4 [shape = 's32[2]{0}', space=sflag, size = 0x8, scoped, tag = 'scoped memory for tpu_custom_call.1']
    #allocation5 [shape = 'u8[131072]{0}', space=vmem, size = 0x20000, scoped, tag = 'input window, operand 1']
    #allocation6 [shape = 's32[2]{0}', space=sflag, size = 0x8, scoped, tag = 'scoped memory for tpu_custom_call.1']
    #allocation7 [shape = 'u8[131072]{0}', space=vmem, size = 0x20000, scoped, tag = 'output window, operand 0']
    %8 = vsyncpa [#allocation3], 0
    %9 = vsyncpa [#allocation6], 0
    %s10 = scalar_lea.sflag [#allocation6], 1
    %11 = vsyncpa %s10, 0
    %12 = vsyncpa [#allocation4], 0
    %s13 = scalar_lea.sflag [#allocation4], 1
    %14 = vsyncpa %s13, 0
    loop: start=0, step=1, limit=4
    $region2: #{tpu_custom_call.1} parent=1 // loop_pre_header
      _
    $region3: #{tpu_custom_call.1} parent=1 // loop_header
      %s16 = sphi 0, %s20
      %p17 = scmp.ge.s32.totalorder %s16, 4
      %s23 = sphi 0, %s35
      %s24 = sphi 0, %s31
      %s25 = sphi 0, %s23
      %s26 = sphi 0, %s24
      %s27 = sphi 0, %s25
      %s28 = sphi 0, %s26
      %s38 = sphi 0, %s40
      %s41 = sphi 0, %s38
      %s42 = sphi 0, %s41
      %s58 = sphi 0, %s42
      %s64 = sphi 0, %s66
      %s67 = sphi 0, %s64
      %s68 = sphi 0, %s67
      %s84 = sphi 0, %s68
      %s90 = sphi 0, %s92
      %s93 = sphi 0, %s90
      %s94 = sphi 0, %s93
      %s110 = sphi 0, %s94
      %s118 = sphi 0, %s120
      %s121 = sphi 0, %s118
      %s122 = sphi 0, %s121
      %s138 = sphi 0, %s122
    $region4: #{tpu_custom_call.1} parent=1 // loop_header_branch
      %19 = sbr.rel (%p17) target = $region8
    $region5: #{tpu_custom_call.1} parent=1 // loop_body
      %s21 = ssub.s32 %s16, 1
      %s22 = ssub.s32 %s16, 2
      %s29 = sadd.s32 1, %s24
      %p30 = scmp.ge.s32.totalorder %s29, 2
      %s31 = scalar_select %p30, 0, %s29
      %s32 = sadd.s32 1, %s23
      %s33 = scalar_select %p30, %s32, %s23
      %p34 = scmp.ge.s32.totalorder %s33, 1
      %s35 = scalar_select %p34, 0, %s33
      %s36 = ssub.s32 %s23, %s35
      %p37 = scmp.eq.s32.totalorder %s36, 0
      %s39 = sadd.s32 %s38, 1
      %s40 = scalar_select %p37, %s38, %s39
      %p43 = pneg %p37
      %p44 = scmp.eq.s32.totalorder %s16, 1
      %p45 = por %p43, %p44
      %p46 = scmp.ne.s32.totalorder %s38, %s41
      %p47 = scmp.eq.s32.totalorder %s16, 0
      %p48 = por %p46, %p47
      %p49 = scmp.ne.s32.totalorder %s38, %s41
      %p50 = scmp.eq.s32.totalorder %s21, 1
      %p51 = por %p49, %p50
      %p52 = scmp.ne.s32.totalorder %s41, %s42
      %p53 = scmp.eq.s32.totalorder %s21, 0
      %p54 = por %p52, %p53
      %p55 = scmp.ne.s32.totalorder %s41, %s42
      %p56 = scmp.eq.s32.totalorder %s22, 1
      %p57 = por %p55, %p56
      %p59 = scmp.ne.s32.totalorder %s42, %s58
      %p60 = scmp.eq.s32.totalorder %s22, 0
      %p61 = por %p59, %p60
      %s62 = ssub.s32 %s24, %s31
      %p63 = scmp.eq.s32.totalorder %s62, 0
      %s65 = sadd.s32 %s64, 1
      %s66 = scalar_select %p63, %s64, %s65
      %p69 = pneg %p63
      %p70 = scmp.eq.s32.totalorder %s16, 1
      %p71 = por %p69, %p70
      %p72 = scmp.ne.s32.totalorder %s64, %s67
      %p73 = scmp.eq.s32.totalorder %s16, 0
      %p74 = por %p72, %p73
      %p75 = scmp.ne.s32.totalorder %s64, %s67
      %p76 = scmp.eq.s32.totalorder %s21, 1
      %p77 = por %p75, %p76
      %p78 = scmp.ne.s32.totalorder %s67, %s68
      %p79 = scmp.eq.s32.totalorder %s21, 0
      %p80 = por %p78, %p79
      %p81 = scmp.ne.s32.totalorder %s67, %s68
      %p82 = scmp.eq.s32.totalorder %s22, 1
      %p83 = por %p81, %p82
      %p85 = scmp.ne.s32.totalorder %s68, %s84
      %p86 = scmp.eq.s32.totalorder %s22, 0
      %p87 = por %p85, %p86
      %s88 = ssub.s32 %s24, %s31
      %p89 = scmp.eq.s32.totalorder %s88, 0
      %s91 = sadd.s32 %s90, 1
      %s92 = scalar_select %p89, %s90, %s91
      %p95 = pneg %p89
      %p96 = scmp.eq.s32.totalorder %s16, 1
      %p97 = por %p95, %p96
      %p98 = scmp.ne.s32.totalorder %s90, %s93
      %p99 = scmp.eq.s32.totalorder %s16, 0
      %p100 = por %p98, %p99
      %p101 = scmp.ne.s32.totalorder %s90, %s93
      %p102 = scmp.eq.s32.totalorder %s21, 1
      %p103 = por %p101, %p102
      %p104 = scmp.ne.s32.totalorder %s93, %s94
      %p105 = scmp.eq.s32.totalorder %s21, 0
      %p106 = por %p104, %p105
      %p107 = scmp.ne.s32.totalorder %s93, %s94
      %p108 = scmp.eq.s32.totalorder %s22, 1
      %p109 = por %p107, %p108
      %p111 = scmp.ne.s32.totalorder %s94, %s110
      %p112 = scmp.eq.s32.totalorder %s22, 0
      %p113 = por %p111, %p112
      %s114 = ssub.s32 %s23, %s35
      %s115 = ssub.s32 %s24, %s31
      %s116 = sor.u32 %s114, %s115
      %p117 = scmp.eq.s32.totalorder %s116, 0
      %s119 = sadd.s32 %s118, 1
      %s120 = scalar_select %p117, %s118, %s119
      %p123 = pneg %p117
      %p124 = scmp.eq.s32.totalorder %s16, 1
      %p125 = por %p123, %p124
      %p126 = scmp.ne.s32.totalorder %s118, %s121
      %p127 = scmp.eq.s32.totalorder %s16, 0
      %p128 = por %p126, %p127
      %p129 = scmp.ne.s32.totalorder %s118, %s121
      %p130 = scmp.eq.s32.totalorder %s21, 1
      %p131 = por %p129, %p130
      %p132 = scmp.ne.s32.totalorder %s121, %s122
      %p133 = scmp.eq.s32.totalorder %s21, 0
      %p134 = por %p132, %p133
      %p135 = scmp.ne.s32.totalorder %s121, %s122
      %p136 = scmp.eq.s32.totalorder %s22, 1
      %p137 = por %p135, %p136
      %p139 = scmp.ne.s32.totalorder %s122, %s138
      %p140 = scmp.eq.s32.totalorder %s22, 0
      %p141 = por %p139, %p140
      %p142 = scmp.le.s32.totalorder 1, %s16
      %p143 = scmp.lt.s32.totalorder %s16, 3
      %p144 = pnand %p142, %p143
      %p145 = pneg %p144
      // Predicated region
      $region9: #{tpu_custom_call.1} parent=5 // pred_check
        _
      $region10: #{tpu_custom_call.1} parent=5 // pred_check_branch
        %147 = sbr.rel (%p144) target = $region12
      $region11: #{tpu_custom_call.1} parent=5 // pred_region
        %s148 = ssub.s32 %s16, 1
        // Predicated region
        $region13: #{tpu_custom_call.1} parent=11 // pred_check
          %p149 = pneg %p54
        $region14: #{tpu_custom_call.1} parent=11 // pred_check_branch
          %151 = sbr.rel (%p149) target = $region16
        $region15: #{tpu_custom_call.1} parent=11 // pred_region
          %s152 = smul.u32 16, %s25
          %s154 = ssub.s32 2048, 2048
          %155 = vsyncadd [#allocation3], %s154
          %s156 = smul.addr %s152, 2
          %s157 = smul.addr %s156, 64
          %s158 = scalar_lea.hbm %s0, %s157
          %s159 = sshll.u32 [#allocation2], 4
          %s160 = int_to_ptr.vmem [resolvable:$true] %s159
          %165 = dma.hbm_to_vmem [thread:$0]  %s158, 2048, %s160, [#allocation3], 128, 128, 8
        $region16: #{tpu_custom_call.1} parent=11 // pred_fallthru
          _
      $region12: #{tpu_custom_call.1} parent=5 // pred_fallthru
        _
      %p166 = scmp.lt.s32.totalorder %s16, 2
      // Predicated region
      $region17: #{tpu_custom_call.1} parent=5 // pred_check
        %p167 = pneg %p166
      $region18: #{tpu_custom_call.1} parent=5 // pred_check_branch
        %169 = sbr.rel (%p167) target = $region20
      $region19: #{tpu_custom_call.1} parent=5 // pred_region
        // Predicated region
        $region21: #{tpu_custom_call.1} parent=19 // pred_check
          %p170 = pneg %p74
        $region22: #{tpu_custom_call.1} parent=19 // pred_check_branch
          %172 = sbr.rel (%p170) target = $region24
        $region23: #{tpu_custom_call.1} parent=19 // pred_region
          %s173 = sand.u32 %s64, 1
          %s174 = scalar_lea.sflag [#allocation6], %s173
          %s175 = sand.u32 %s64, 1
          %s176 = smul.addr %s175, 128
          %s177 = scalar_lea.vmem [#allocation5], %s176
          %s179 = ssub.s32 2048, 2048
          %180 = vsyncadd %s174, %s179
          %s181 = smul.addr %s24, 64
          %s182 = scalar_lea.hbm %s1, %s181
          %s183 = sshll.u32 %s177, 4
          %s184 = int_to_ptr.vmem [resolvable:$true] %s183
          %189 = dma.hbm_to_vmem [thread:$0]  %s182, 2048, %s184, %s174, 128, 64, 4
        $region24: #{tpu_custom_call.1} parent=19 // pred_fallthru
          _
        // Predicated region
        $region25: #{tpu_custom_call.1} parent=19 // pred_check
          %p190 = pneg %p100
        $region26: #{tpu_custom_call.1} parent=19 // pred_check_branch
          %192 = sbr.rel (%p190) target = $region28
        $region27: #{tpu_custom_call.1} parent=19 // pred_region
          %p193 = scmp.lt.s32.totalorder %s24, 1
          %s194 = scalar_select %p193, %s24, 1
          %s195 = scalar_lea.vmem %s2, %s194
        $region28: #{tpu_custom_call.1} parent=19 // pred_fallthru
          _
      $region20: #{tpu_custom_call.1} parent=5 // pred_fallthru
        _
      %p196 = scmp.le.s32.totalorder 1, %s16
      %p197 = scmp.lt.s32.totalorder %s16, 3
      %p198 = pnand %p196, %p197
      %p199 = pneg %p198
      // Predicated region
      $region29: #{tpu_custom_call.1} parent=5 // pred_check
        _
      $region30: #{tpu_custom_call.1} parent=5 // pred_check_branch
        %201 = sbr.rel (%p198) target = $region32
      $region31: #{tpu_custom_call.1} parent=5 // pred_region
        %s202 = ssub.s32 %s16, 1
        // Predicated region
        $region33: #{tpu_custom_call.1} parent=31 // pred_check
          %p203 = pneg %p54
        $region34: #{tpu_custom_call.1} parent=31 // pred_check_branch
          %205 = sbr.rel (%p203) target = $region36
        $region35: #{tpu_custom_call.1} parent=31 // pred_region
          %206 = dma.done [#allocation3], 2048
        $region36: #{tpu_custom_call.1} parent=31 // pred_fallthru
          _
        %s207 = sand.u32 %s67, 1
        %s208 = scalar_lea.sflag [#allocation6], %s207
        %s209 = sand.u32 %s67, 1
        %s210 = smul.addr %s209, 128
        %s211 = scalar_lea.vmem [#allocation5], %s210
        // Predicated region
        $region37: #{tpu_custom_call.1} parent=31 // pred_check
          %p212 = pneg %p80
        $region38: #{tpu_custom_call.1} parent=31 // pred_check_branch
          %214 = sbr.rel (%p212) target = $region40
        $region39: #{tpu_custom_call.1} parent=31 // pred_region
          %215 = dma.done %s208, 2048
        $region40: #{tpu_custom_call.1} parent=31 // pred_fallthru
          _
        %p216 = pneg %p54
        %p217 = pneg %p51
        %s218 = sand.u32 %s67, 1
        %s219 = scalar_lea.sflag [#allocation6], %s218
        %s220 = sand.u32 %s67, 1
        %s221 = smul.addr %s220, 128
        %s222 = scalar_lea.vmem [#allocation5], %s221
        %p223 = pneg %p80
        %p224 = pneg %p77
        %p225 = scmp.lt.s32.totalorder %s26, 1
        %s226 = scalar_select %p225, %s26, 1
        %s227 = scalar_lea.vmem %s2, %s226
        %p228 = pneg %p106
        %p229 = pneg %p103
        %p230 = pneg %p134
        %p231 = pneg %p131
        %s232 = sand.u32 %s121, 1
        %s233 = scalar_lea.sflag [#allocation4], %s232
        %s234 = sand.u32 %s121, 1
        %s235 = smul.addr %s234, 128
        %s236 = scalar_lea.vmem [#allocation7], %s235
        %s237 = smul.u32 16, %s25
        %p238 = scmp.lt.s32.totalorder %s26, 1
        %s239 = scalar_select %p238, %s26, 1
        %s240 = scalar_lea.vmem %s2, %s239
        %s241 = smul.u32 16, %s25
        %v243 = vld [vmem:[#allocation2] sm:$0xff]
        %v244 = vld [vmem:[#allocation2 + $0x8] sm:$0xff]
        %v245 = vld [vmem:[#allocation2 + $0x10] sm:$0xff]
        %v246 = vld [vmem:[#allocation2 + $0x18] sm:$0xff]
        %v247 = vld [vmem:[#allocation2 + $0x20] sm:$0xff]
        %v248 = vld [vmem:[#allocation2 + $0x28] sm:$0xff]
        %v249 = vld [vmem:[#allocation2 + $0x30] sm:$0xff]
        %v250 = vld [vmem:[#allocation2 + $0x38] sm:$0xff]
        %v251 = vld [vmem:[#allocation2 + $0x40] sm:$0xff]
        %v252 = vld [vmem:[#allocation2 + $0x48] sm:$0xff]
        %v253 = vld [vmem:[#allocation2 + $0x50] sm:$0xff]
        %v254 = vld [vmem:[#allocation2 + $0x58] sm:$0xff]
        %v255 = vld [vmem:[#allocation2 + $0x60] sm:$0xff]
        %v256 = vld [vmem:[#allocation2 + $0x68] sm:$0xff]
        %v257 = vld [vmem:[#allocation2 + $0x70] sm:$0xff]
        %v258 = vld [vmem:[#allocation2 + $0x78] sm:$0xff]
        %v259 = vld [vmem:[%s211] sm:$0xf]
        %v260 = vld [vmem:[%s211 + $0x4] sm:$0xf]
        %v261 = vld [vmem:[%s211 + $0x8] sm:$0xf]
        %v262 = vld [vmem:[%s211 + $0xc] sm:$0xf]
        %v263 = vld [vmem:[%s211 + $0x10] sm:$0xf]
        %v264 = vld [vmem:[%s211 + $0x14] sm:$0xf]
        %v265 = vld [vmem:[%s211 + $0x18] sm:$0xf]
        %v266 = vld [vmem:[%s211 + $0x1c] sm:$0xf]
        %v267 = vld [vmem:[%s211 + $0x20] sm:$0xf]
        %v268 = vld [vmem:[%s211 + $0x24] sm:$0xf]
        %v269 = vld [vmem:[%s211 + $0x28] sm:$0xf]
        %v270 = vld [vmem:[%s211 + $0x2c] sm:$0xf]
        %v271 = vld [vmem:[%s211 + $0x30] sm:$0xf]
        %v272 = vld [vmem:[%s211 + $0x34] sm:$0xf]
        %v273 = vld [vmem:[%s211 + $0x38] sm:$0xf]
        %v274 = vld [vmem:[%s211 + $0x3c] sm:$0xf]
        %v275 = vld [vmem:[%s211 + $0x40] sm:$0xf]
        %v276 = vld [vmem:[%s211 + $0x44] sm:$0xf]
        %v277 = vld [vmem:[%s211 + $0x48] sm:$0xf]
        %v278 = vld [vmem:[%s211 + $0x4c] sm:$0xf]
        %v279 = vld [vmem:[%s211 + $0x50] sm:$0xf]
        %v280 = vld [vmem:[%s211 + $0x54] sm:$0xf]
        %v281 = vld [vmem:[%s211 + $0x58] sm:$0xf]
        %v282 = vld [vmem:[%s211 + $0x5c] sm:$0xf]
        %v283 = vld [vmem:[%s211 + $0x60] sm:$0xf]
        %v284 = vld [vmem:[%s211 + $0x64] sm:$0xf]
        %v285 = vld [vmem:[%s211 + $0x68] sm:$0xf]
        %v286 = vld [vmem:[%s211 + $0x6c] sm:$0xf]
        %v287 = vld [vmem:[%s211 + $0x70] sm:$0xf]
        %v288 = vld [vmem:[%s211 + $0x74] sm:$0xf]
        %v289 = vld [vmem:[%s211 + $0x78] sm:$0xf]
        %v290 = vld [vmem:[%s211 + $0x7c] sm:$0xf]
        %v291 = vld [vmem:[%s240] sm:$0x1]
        %v293 = vlaneseq
        %v294 = vshrl.u32 %v293, 7
        %v295 = vsub.s32 0, %v294
        %v296 = vrot.slane %v291, %v295
        %v314 = vunpack.c.l.b16 %v243
        %v315 = vunpack.c.h.b16 %v243
        %v316 = vunpack.c.l.b16 %v244
        %v317 = vunpack.c.h.b16 %v244
        %v318 = vunpack.c.l.b16 %v245
        %v319 = vunpack.c.h.b16 %v245
        %v320 = vunpack.c.l.b16 %v246
        %v321 = vunpack.c.h.b16 %v246
        %v322 = vunpack.c.l.b16 %v247
        %v323 = vunpack.c.h.b16 %v247
        %v324 = vunpack.c.l.b16 %v248
        %v325 = vunpack.c.h.b16 %v248
        %v326 = vunpack.c.l.b16 %v249
        %v327 = vunpack.c.h.b16 %v249
        %v328 = vunpack.c.l.b16 %v250
        %v329 = vunpack.c.h.b16 %v250
        %v330 = vunpack.c.l.b16 %v251
        %v331 = vunpack.c.h.b16 %v251
        %v332 = vunpack.c.l.b16 %v252
        %v333 = vunpack.c.h.b16 %v252
        %v334 = vunpack.c.l.b16 %v253
        %v335 = vunpack.c.h.b16 %v253
        %v336 = vunpack.c.l.b16 %v254
        %v337 = vunpack.c.h.b16 %v254
        %v338 = vunpack.c.l.b16 %v255
        %v339 = vunpack.c.h.b16 %v255
        %v340 = vunpack.c.l.b16 %v256
        %v341 = vunpack.c.h.b16 %v256
        %v342 = vunpack.c.l.b16 %v257
        %v343 = vunpack.c.h.b16 %v257
        %v344 = vunpack.c.l.b16 %v258
        %v345 = vunpack.c.h.b16 %v258
        %v346 = vpack.c.b16 %v316, %v314
        %v347 = vpack.c.b16 %v317, %v315
        %v348 = vpack.c.b16 %v320, %v318
        %v349 = vpack.c.b16 %v321, %v319
        %v350 = vpack.c.b16 %v324, %v322
        %v351 = vpack.c.b16 %v325, %v323
        %v352 = vpack.c.b16 %v328, %v326
        %v353 = vpack.c.b16 %v329, %v327
        %v354 = vpack.c.b16 %v332, %v330
        %v355 = vpack.c.b16 %v333, %v331
        %v356 = vpack.c.b16 %v336, %v334
        %v357 = vpack.c.b16 %v337, %v335
        %v358 = vpack.c.b16 %v340, %v338
        %v359 = vpack.c.b16 %v341, %v339
        %v360 = vpack.c.b16 %v344, %v342
        %v361 = vpack.c.b16 %v345, %v343
        %v410 = vunpack.c.l.b16 %v259
        %v411 = vunpack.c.l.b16 %v260
        %v412 = vunpack.c.l.b16 %v261
        %v413 = vunpack.c.l.b16 %v262
        %v414 = vunpack.c.l.b16 %v263
        %v415 = vunpack.c.l.b16 %v264
        %v416 = vunpack.c.l.b16 %v265
        %v417 = vunpack.c.l.b16 %v266
        %v418 = vunpack.c.l.b16 %v267
        %v419 = vunpack.c.l.b16 %v268
        %v420 = vunpack.c.l.b16 %v269
        %v421 = vunpack.c.l.b16 %v270
        %v422 = vunpack.c.l.b16 %v271
        %v423 = vunpack.c.l.b16 %v272
        %v424 = vunpack.c.l.b16 %v273
        %v425 = vunpack.c.l.b16 %v274
        %v426 = vunpack.c.l.b16 %v275
        %v427 = vunpack.c.l.b16 %v276
        %v428 = vunpack.c.l.b16 %v277
        %v429 = vunpack.c.l.b16 %v278
        %v430 = vunpack.c.l.b16 %v279
        %v431 = vunpack.c.l.b16 %v280
        %v432 = vunpack.c.l.b16 %v281
        %v433 = vunpack.c.l.b16 %v282
        %v434 = vunpack.c.l.b16 %v283
        %v435 = vunpack.c.l.b16 %v284
        %v436 = vunpack.c.l.b16 %v285
        %v437 = vunpack.c.l.b16 %v286
        %v438 = vunpack.c.l.b16 %v287
        %v439 = vunpack.c.l.b16 %v288
        %v440 = vunpack.c.l.b16 %v289
        %v441 = vunpack.c.l.b16 %v290
        %v442 = vpack.c.b16 %v411, %v410
        %v443 = vpack.c.b16 %v413, %v412
        %v444 = vpack.c.b16 %v415, %v414
        %v445 = vpack.c.b16 %v417, %v416
        %v446 = vpack.c.b16 %v419, %v418
        %v447 = vpack.c.b16 %v421, %v420
        %v448 = vpack.c.b16 %v423, %v422
        %v449 = vpack.c.b16 %v425, %v424
        %v450 = vpack.c.b16 %v427, %v426
        %v451 = vpack.c.b16 %v429, %v428
        %v452 = vpack.c.b16 %v431, %v430
        %v453 = vpack.c.b16 %v433, %v432
        %v454 = vpack.c.b16 %v435, %v434
        %v455 = vpack.c.b16 %v437, %v436
        %v456 = vpack.c.b16 %v439, %v438
        %v457 = vpack.c.b16 %v441, %v440
        %474 = vmatprep.subr.bf16.mxu0 0
        %475 = vmatpush1.bf16.msra.mxu0 %v442
        %476 = vmatprep.subr.bf16.mxu0 0
        %477 = vmatpush1.bf16.msra.mxu0 %v443
        %478 = vmatprep.subr.bf16.mxu0 0
        %479 = vmatpush1.bf16.msra.mxu0 %v444
        %480 = vmatprep.subr.bf16.mxu0 0
        %481 = vmatpush1.bf16.msra.mxu0 %v445
        %482 = vmatprep.subr.bf16.mxu0 0
        %483 = vmatpush1.bf16.msra.mxu0 %v446
        %484 = vmatprep.subr.bf16.mxu0 0
        %485 = vmatpush1.bf16.msra.mxu0 %v447
        %486 = vmatprep.subr.bf16.mxu0 0
        %487 = vmatpush1.bf16.msra.mxu0 %v448
        %488 = vmatprep.subr.bf16.mxu0 0
        %489 = vmatpush1.bf16.msra.mxu0 %v449
        %490 = vmatprep.subr.bf16.mxu0 0
        %491 = vmatpush1.bf16.msra.mxu0 %v450
        %492 = vmatprep.subr.bf16.mxu0 0
        %493 = vmatpush1.bf16.msra.mxu0 %v451
        %494 = vmatprep.subr.bf16.mxu0 0
        %495 = vmatpush1.bf16.msra.mxu0 %v452
        %496 = vmatprep.subr.bf16.mxu0 0
        %497 = vmatpush1.bf16.msra.mxu0 %v453
        %498 = vmatprep.subr.bf16.mxu0 0
        %499 = vmatpush1.bf16.msra.mxu0 %v454
        %500 = vmatprep.subr.bf16.mxu0 0
        %501 = vmatpush1.bf16.msra.mxu0 %v455
        %502 = vmatprep.subr.bf16.mxu0 0
        %503 = vmatpush1.bf16.msra.mxu0 %v456
        %504 = vmatprep.subr.bf16.mxu0 0
        %505 = vmatpush1.bf16.msra.mxu0 %v457
        %506 = vmatprep.mubr.bf16.mxu0 %v347
        %507 = vmatmul.mubr.bf16.gmra.mrb[0].mxu0 %v346
        %v508 = vpop.f32.mrb[0].mxu0
        %v509 = vadd.f32 %v296, %v508
        %v510 = vpop.f32.mrb[0].mxu0
        %v511 = vpop.f32.mrb[0].mxu0
        %v512 = vadd.f32 %v296, %v511
        %v513 = vpop.f32.mrb[0].mxu0
        %514 = vmatprep.mubr.bf16.mxu0 %v349
        %515 = vmatmul.mubr.bf16.gmra.mrb[0].mxu0 %v348
        %v516 = vpop.f32.mrb[0].mxu0
        %v517 = vadd.f32 %v296, %v516
        %v518 = vpop.f32.mrb[0].mxu0
        %v519 = vpop.f32.mrb[0].mxu0
        %v520 = vadd.f32 %v296, %v519
        %v521 = vpop.f32.mrb[0].mxu0
        %522 = vmatprep.mubr.bf16.mxu0 %v351
        %523 = vmatmul.mubr.bf16.gmra.mrb[0].mxu0 %v350
        %v524 = vpop.f32.mrb[0].mxu0
        %v525 = vadd.f32 %v296, %v524
        %v526 = vpop.f32.mrb[0].mxu0
        %v527 = vpop.f32.mrb[0].mxu0
        %v528 = vadd.f32 %v296, %v527
        %v529 = vpop.f32.mrb[0].mxu0
        %530 = vmatprep.mubr.bf16.mxu0 %v353
        %531 = vmatmul.mubr.bf16.gmra.mrb[0].mxu0 %v352
        %v532 = vpop.f32.mrb[0].mxu0
        %v533 = vadd.f32 %v296, %v532
        %v534 = vpop.f32.mrb[0].mxu0
        %v535 = vpop.f32.mrb[0].mxu0
        %v536 = vadd.f32 %v296, %v535
        %v537 = vpop.f32.mrb[0].mxu0
        %538 = vmatprep.mubr.bf16.mxu0 %v355
        %539 = vmatmul.mubr.bf16.gmra.mrb[0].mxu0 %v354
        %v540 = vpop.f32.mrb[0].mxu0
        %v541 = vadd.f32 %v296, %v540
        %v542 = vpop.f32.mrb[0].mxu0
        %v543 = vpop.f32.mrb[0].mxu0
        %v544 = vadd.f32 %v296, %v543
        %v545 = vpop.f32.mrb[0].mxu0
        %546 = vmatprep.mubr.bf16.mxu0 %v357
        %547 = vmatmul.mubr.bf16.gmra.mrb[0].mxu0 %v356
        %v548 = vpop.f32.mrb[0].mxu0
        %v549 = vadd.f32 %v296, %v548
        %v550 = vpop.f32.mrb[0].mxu0
        %v551 = vpop.f32.mrb[0].mxu0
        %v552 = vadd.f32 %v296, %v551
        %v553 = vpop.f32.mrb[0].mxu0
        %554 = vmatprep.mubr.bf16.mxu0 %v359
        %555 = vmatmul.mubr.bf16.gmra.mrb[0].mxu0 %v358
        %v556 = vpop.f32.mrb[0].mxu0
        %v557 = vadd.f32 %v296, %v556
        %v558 = vpop.f32.mrb[0].mxu0
        %v559 = vpop.f32.mrb[0].mxu0
        %v560 = vadd.f32 %v296, %v559
        %v561 = vpop.f32.mrb[0].mxu0
        %562 = vmatprep.mubr.bf16.mxu0 %v361
        %563 = vmatmul.mubr.bf16.gmra.mrb[0].mxu0 %v360
        %v564 = vpop.f32.mrb[0].mxu0
        %v565 = vadd.f32 %v296, %v564
        %v566 = vpop.f32.mrb[0].mxu0
        %v567 = vpop.f32.mrb[0].mxu0
        %v568 = vadd.f32 %v296, %v567
        %v569 = vpop.f32.mrb[0].mxu0
        %570 = vdwg.mxu0
        %571 = vst [vmem:[%s236] sm:$0xff] %v509
        %572 = vst [vmem:[%s236 + $0x8] sm:$0xff] %v512
        %573 = vst [vmem:[%s236 + $0x10] sm:$0xff] %v517
        %574 = vst [vmem:[%s236 + $0x18] sm:$0xff] %v520
        %575 = vst [vmem:[%s236 + $0x20] sm:$0xff] %v525
        %576 = vst [vmem:[%s236 + $0x28] sm:$0xff] %v528
        %577 = vst [vmem:[%s236 + $0x30] sm:$0xff] %v533
        %578 = vst [vmem:[%s236 + $0x38] sm:$0xff] %v536
        %579 = vst [vmem:[%s236 + $0x40] sm:$0xff] %v541
        %580 = vst [vmem:[%s236 + $0x48] sm:$0xff] %v544
        %581 = vst [vmem:[%s236 + $0x50] sm:$0xff] %v549
        %582 = vst [vmem:[%s236 + $0x58] sm:$0xff] %v552
        %583 = vst [vmem:[%s236 + $0x60] sm:$0xff] %v557
        %584 = vst [vmem:[%s236 + $0x68] sm:$0xff] %v560
        %585 = vst [vmem:[%s236 + $0x70] sm:$0xff] %v565
        %586 = vst [vmem:[%s236 + $0x78] sm:$0xff] %v568
        %s587 = sand.u32 %s121, 1
        %s588 = scalar_lea.sflag [#allocation4], %s587
        %s589 = sand.u32 %s121, 1
        %s590 = smul.addr %s589, 128
        %s591 = scalar_lea.vmem [#allocation7], %s590
        // Predicated region
        $region41: #{tpu_custom_call.1} parent=31 // pred_check
          %p592 = pneg %p131
        $region42: #{tpu_custom_call.1} parent=31 // pred_check_branch
          %594 = sbr.rel (%p592) target = $region44
        $region43: #{tpu_custom_call.1} parent=31 // pred_region
          %s595 = smul.u32 16, %s25
          %s597 = ssub.s32 2048, 2048
          %598 = vsyncadd %s588, %s597
          %s599 = smul.addr %s595, 2
          %s600 = sadd.s32 %s26, %s599
          %s601 = smul.addr %s600, 128
          %s602 = scalar_lea.hbm %s3, %s601
          %s603 = sshll.u32 %s591, 4
          %s604 = int_to_ptr.vmem [resolvable:$true] %s603
          %609 = dma.vmem_to_hbm [thread:$0]  %s604, 2048, %s602, %s588, 128, 256, 8
        $region44: #{tpu_custom_call.1} parent=31 // pred_fallthru
          _
      $region32: #{tpu_custom_call.1} parent=5 // pred_fallthru
        _
      %p610 = scmp.le.s32.totalorder 2, %s16
      // Predicated region
      $region45: #{tpu_custom_call.1} parent=5 // pred_check
        %p611 = pneg %p610
      $region46: #{tpu_custom_call.1} parent=5 // pred_check_branch
        %613 = sbr.rel (%p611) target = $region48
      $region47: #{tpu_custom_call.1} parent=5 // pred_region
        %s614 = ssub.s32 %s16, 2
        // Predicated region
        $region49: #{tpu_custom_call.1} parent=47 // pred_check
          %p615 = pneg %p137
        $region50: #{tpu_custom_call.1} parent=47 // pred_check_branch
          %617 = sbr.rel (%p615) target = $region52
        $region51: #{tpu_custom_call.1} parent=47 // pred_region
          %s618 = sand.u32 %s122, 1
          %s619 = scalar_lea.sflag [#allocation4], %s618
          %s620 = sand.u32 %s122, 1
          %s621 = smul.addr %s620, 128
          %s622 = scalar_lea.vmem [#allocation7], %s621
          %623 = dma.done %s619, 2048
        $region52: #{tpu_custom_call.1} parent=47 // pred_fallthru
          _
      $region48: #{tpu_custom_call.1} parent=5 // pred_fallthru
        _
    $region6: #{tpu_custom_call.1} parent=1 // loop_footer
      %s20 = sadd.s32 1, %s16
    $region7: #{tpu_custom_call.1} parent=1 // loop_footer_branch
      %15 = sbr.rel target = $region3
    $region8: #{tpu_custom_call.1} parent=1 // loop_exit
      _
    %624 = vsyncpa [#allocation3], 1
    %s625 = scalar_lea.sflag [#allocation3], 1
    %626 = vsyncpa %s625, 1
    %627 = vsyncpa [#allocation6], 1
    %s628 = scalar_lea.sflag [#allocation6], 1
    %629 = vsyncpa %s628, 1
    %630 = vsyncpa [#allocation4], 1
    %s631 = scalar_lea.sflag [#allocation4], 1
    %632 = vsyncpa %s631, 1

</llo_original>
